<compile_context>
chip_gen: v6e
topology: v6e:2x2x1
jax: 0.10.0
libtpu: 0.0.40
codegen_flags: <defaults>
</compile_context>

<pallas_src>
import jax
import jax.numpy as jnp
from jax import lax
from jax.experimental import pallas as pl
from jax.experimental.pallas import tpu as pltpu


def conv_gemm_kernel(p_ref, w_ref, s_ref, b_ref, o_ref):
    # p_ref: (TM, 9*Cin)     bf16 im2col patch tile
    # w_ref: (9*Cin, Cout_p) bf16 conv weights (HWIO-flattened, unscaled), resident
    # s_ref: (1, Cout_p)     f32 BN scale (gamma / sqrt(var+eps)), resident
    # b_ref: (1, Cout_p)     f32 BN bias  (beta - mean*scale), resident
    # o_ref: (TM, Cout_p)    bf16 output tile (lane-dense, unmasked store)
    acc = jnp.dot(p_ref[...], w_ref[...], preferred_element_type=jnp.float32)
    acc = jnp.maximum(acc * s_ref[...] + b_ref[...], 0.0)     # f32 BN + ReLU epilogue
    o_ref[...] = acc.astype(o_ref.dtype)


def _round_up(x, m):
    return (x + m - 1) // m * m


def conv_block_forward(x_nchw, weight_oihw, gamma, beta, running_mean, running_var,
                       eps=1e-5, droprate=0.0):
    """Forward of ConvBlock (inference BN stats). Inputs are NCHW / OIHW."""
    N, Cin, H, W = x_nchw.shape
    Cout = weight_oihw.shape[0]
    K = 9 * Cin
    Cout_p = _round_up(Cout, 128)        # lane-dense output channels
    M = N * H * W

    # --- weights: OIHW -> (ky,kx,ci)-major (9*Cin, Cout), zero-pad Cout, bf16 ---
    w = jnp.transpose(weight_oihw, (2, 3, 1, 0)).reshape(K, Cout)
    w = jnp.pad(w, ((0, 0), (0, Cout_p - Cout))).astype(jnp.bfloat16)

    # --- BN as per-channel f32 scale/bias, applied in the kernel epilogue ---
    scale = (gamma * lax.rsqrt(running_var + eps)).astype(jnp.float32)
    bias = (beta - running_mean * scale).astype(jnp.float32)
    scale_p = jnp.pad(scale, (0, Cout_p - Cout)).reshape(1, Cout_p)
    bias_p = jnp.pad(bias, (0, Cout_p - Cout)).reshape(1, Cout_p)

    # --- im2col patches in XLA (fused transpose + halo pad + gather + bf16 cast) ---
    x = jnp.transpose(x_nchw, (0, 2, 3, 1))                               # NHWC
    x = jnp.pad(x, ((0, 0), (1, 1), (1, 1), (0, 0))).astype(jnp.bfloat16)  # (N,H+2,W+2,Cin)
    taps = [x[:, ky:ky + H, kx:kx + W, :] for ky in range(3) for kx in range(3)]
    patches = jnp.stack(taps, axis=3).reshape(M, K)                       # (M, 9*Cin)

    # --- M tiling: 256-512 row tiles (MXU-filling, overhead-amortizing) ---
    if M >= 1024:
        TM = 512
    elif M >= 512:
        TM = 256          # keeps >= 2 grid steps (one per v7x TensorCore) at mid sizes
    else:
        TM = _round_up(M, 16)

    def _vmem_bytes(tm):
        # double-buffered streaming blocks + resident weights/scale/bias (x2 buffers)
        return (2 * (tm * K + tm * Cout_p) * 2
                + 2 * K * Cout_p * 2
                + 2 * 2 * Cout_p * 4)

    # v7x-safe fallback: shrink TM if a huge Cin/Cout layer would overflow VMEM.
    while TM > 16 and _vmem_bytes(TM) > 24 * 2**20:
        TM = max(16, ((TM // 2) // 16) * 16)

    M_p = _round_up(M, TM)
    if M_p > M:
        patches = jnp.pad(patches, ((0, M_p - M), (0, 0)))
    grid = (M_p // TM,)

    vmem_limit = int(min(100 * 2**20, max(32 * 2**20, 4 * _vmem_bytes(TM))))

    cost = pl.CostEstimate(
        flops=2 * M_p * K * Cout_p,
        bytes_accessed=(M_p * K * 2 + K * Cout_p * 2 + 2 * Cout_p * 4
                        + M_p * Cout_p * 2),
        transcendentals=0,
    )

    out_flat = pl.pallas_call(
        conv_gemm_kernel,
        out_shape=jax.ShapeDtypeStruct((M_p, Cout_p), jnp.bfloat16),
        grid_spec=pltpu.PrefetchScalarGridSpec(
            num_scalar_prefetch=0,
            grid=grid,
            in_specs=[
                pl.BlockSpec((TM, K), lambda i: (i, 0)),         # streaming patch tile
                pl.BlockSpec((K, Cout_p), lambda i: (0, 0)),     # resident weights
                pl.BlockSpec((1, Cout_p), lambda i: (0, 0)),     # resident BN scale
                pl.BlockSpec((1, Cout_p), lambda i: (0, 0)),     # resident BN bias
            ],
            out_specs=pl.BlockSpec((TM, Cout_p), lambda i: (i, 0)),
        ),
        compiler_params=pltpu.CompilerParams(
            dimension_semantics=("parallel",),
            vmem_limit_bytes=vmem_limit,
        ),
        cost_estimate=cost,
    )(patches, w, scale_p, bias_p)

    # TODO(synk): F.dropout path (droprate > 0, training=True) not implemented;
    # the module default droprate=0.0 makes it a no-op.
    out = out_flat[:M, :Cout].reshape(N, H, W, Cout)       # drop M/channel padding
    out = jnp.transpose(out, (0, 3, 1, 2)).astype(jnp.float32)   # NHWC -> NCHW, f32
    return out


def _reference(x_nchw, weight_oihw, gamma, beta, running_mean, running_var, eps=1e-5):
    y = lax.conv_general_dilated(
        x_nchw, weight_oihw, window_strides=(1, 1), padding="SAME",
        dimension_numbers=("NCHW", "OIHW", "NCHW"),
    )
    scale = gamma / jnp.sqrt(running_var + eps)
    bias = beta - running_mean * scale
    y = y * scale[None, :, None, None] + bias[None, :, None, None]
    return jnp.maximum(y, 0.0)


if __name__ == "__main__":
    key = jax.random.PRNGKey(0)
    kx_, kw_, kg_, kb_, km_, kv_ = jax.random.split(key, 6)

    N, Cin, Cout, H, W = 2, 4, 8, 16, 16

    x = jax.random.normal(kx_, (N, Cin, H, W), jnp.float32)
    weight = 0.1 * jax.random.normal(kw_, (Cout, Cin, 3, 3), jnp.float32)      # conv.weight
    gamma = 1.0 + 0.1 * jax.random.normal(kg_, (Cout,), jnp.float32)           # bn.weight
    beta = 0.1 * jax.random.normal(kb_, (Cout,), jnp.float32)                  # bn.bias
    running_mean = 0.1 * jax.random.normal(km_, (Cout,), jnp.float32)          # bn.running_mean
    running_var = jnp.abs(jax.random.normal(kv_, (Cout,), jnp.float32)) + 0.5  # bn.running_var

    fwd = jax.jit(conv_block_forward)
    out = jax.block_until_ready(fwd(x, weight, gamma, beta, running_mean, running_var))

    ref = _reference(x, weight, gamma, beta, running_mean, running_var)
    assert out.shape == (N, Cout, H, W)
    max_err = jnp.max(jnp.abs(out - ref))
    # bf16 matmul inputs + bf16 store (f32 accumulation/epilogue) -> loose tolerance vs f32 ref.
    assert jnp.allclose(out, ref, rtol=5e-2, atol=5e-2), f"mismatch vs reference (max abs err {max_err})"

    print("KERNEL_OK")
</pallas_src>

<mosaic_0001>
module attributes {stable_mosaic.version = 11 : i64} {
  func.func @conv_gemm_kernel(%arg0: i32, %arg1: memref<256x36xbf16, #tpu.memory_space<vmem>>, %arg2: memref<36x128xbf16, #tpu.memory_space<vmem>>, %arg3: memref<1x128xf32, #tpu.memory_space<vmem>>, %arg4: memref<1x128xf32, #tpu.memory_space<vmem>>, %arg5: memref<256x128xbf16, #tpu.memory_space<vmem>>) attributes {dimension_semantics = [#tpu.dimension_semantics<parallel>], iteration_bounds = array<i64: 2>, scalar_prefetch = 0 : i64, scratch_operands = 0 : i64, tpu.core_type = #tpu.core_type<tc>, window_params = [{transform_indices = @transform_0, window_bounds = array<i64: 256, 36>}, {pipeline_mode = #tpu.pipeline_mode<synchronous>, transform_indices = @transform_1, window_bounds = array<i64: 36, 128>}, {pipeline_mode = #tpu.pipeline_mode<synchronous>, transform_indices = @transform_2, window_bounds = array<i64: 1, 128>}, {pipeline_mode = #tpu.pipeline_mode<synchronous>, transform_indices = @transform_3, window_bounds = array<i64: 1, 128>}, {transform_indices = @transform_4, window_bounds = array<i64: 256, 128>}]} {
    %c0 = arith.constant 0 : index
    %c0_0 = arith.constant 0 : index
    %0 = vector.load %arg1[%c0, %c0_0] : memref<256x36xbf16, #tpu.memory_space<vmem>>, vector<256x36xbf16>
    %c0_1 = arith.constant 0 : index
    %c0_2 = arith.constant 0 : index
    %1 = vector.load %arg2[%c0_1, %c0_2] : memref<36x128xbf16, #tpu.memory_space<vmem>>, vector<36x128xbf16>
    %cst = arith.constant dense<0.000000e+00> : vector<256x128xf32>
    %2 = tpu.matmul %0, %1, %cst {dimension_numbers = #tpu.dot_dimension_numbers<[1], [0], [0], [1], [0, 0, 1, 1], [], []>} : vector<256x36xbf16>, vector<36x128xbf16>, vector<256x128xf32> -> vector<256x128xf32>
    %c0_3 = arith.constant 0 : index
    %c0_4 = arith.constant 0 : index
    %3 = vector.load %arg3[%c0_3, %c0_4] : memref<1x128xf32, #tpu.memory_space<vmem>>, vector<1x128xf32>
    %4 = vector.broadcast %3 : vector<1x128xf32> to vector<256x128xf32>
    %5 = arith.mulf %2, %4 : vector<256x128xf32>
    %c0_5 = arith.constant 0 : index
    %c0_6 = arith.constant 0 : index
    %6 = vector.load %arg4[%c0_5, %c0_6] : memref<1x128xf32, #tpu.memory_space<vmem>>, vector<1x128xf32>
    %7 = vector.broadcast %6 : vector<1x128xf32> to vector<256x128xf32>
    %8 = arith.addf %5, %7 : vector<256x128xf32>
    %cst_7 = arith.constant 0.000000e+00 : f32
    %9 = vector.broadcast %cst_7 : f32 to vector<256x128xf32>
    %10 = arith.maximumf %8, %9 : vector<256x128xf32>
    %11 = arith.truncf %10 : vector<256x128xf32> to vector<256x128xbf16>
    %c0_8 = arith.constant 0 : index
    %c0_9 = arith.constant 0 : index
    %12 = vector.load %arg5[%c0_8, %c0_9] : memref<256x128xbf16, #tpu.memory_space<vmem>>, vector<256x128xbf16>
    tpu.vector_store %arg5[%c0_8, %c0_9], %11 {strides = array<i32>} : memref<256x128xbf16, #tpu.memory_space<vmem>>, vector<256x128xbf16>,
    return
  }
  func.func @transform_0(%arg0: i32) -> (i32, i32) {
    %c0_i32 = arith.constant 0 : i32
    %c0_i32_0 = arith.constant 0 : i32
    return %arg0, %c0_i32 : i32, i32
  }
  func.func @transform_1(%arg0: i32) -> (i32, i32) {
    %c0_i32 = arith.constant 0 : i32
    %c0_i32_0 = arith.constant 0 : i32
    %c0_i32_1 = arith.constant 0 : i32
    return %c0_i32, %c0_i32_0 : i32, i32
  }
  func.func @transform_2(%arg0: i32) -> (i32, i32) {
    %c0_i32 = arith.constant 0 : i32
    %c0_i32_0 = arith.constant 0 : i32
    %c0_i32_1 = arith.constant 0 : i32
    return %c0_i32, %c0_i32_0 : i32, i32
  }
  func.func @transform_3(%arg0: i32) -> (i32, i32) {
    %c0_i32 = arith.constant 0 : i32
    %c0_i32_0 = arith.constant 0 : i32
    %c0_i32_1 = arith.constant 0 : i32
    return %c0_i32, %c0_i32_0 : i32, i32
  }
  func.func @transform_4(%arg0: i32) -> (i32, i32) {
    %c0_i32 = arith.constant 0 : i32
    %c0_i32_0 = arith.constant 0 : i32
    return %arg0, %c0_i32 : i32, i32
  }
}

</mosaic_0001>

<llo_original>
// kernel: conv_block_forward.1
$region0: #{conv_block_forward.1}
  #allocation0 [shape = 'u32[]', space=smem, size = 0x4, offset = 0x4, fixed_abs, tag = 'smem constant byte address 0x4 - core index']
  #allocation1 [shape = 'u32[144,128]{1,0:T(1,128)}', space=vmem, size = 0x12000, scoped, tag = 'internal scratch']
  %s0 = inlined_call_operand.vmem [shape: bf16[512,36], index: 0, kind: input, shape index: {}]
  %s1 = inlined_call_operand.vmem [shape: bf16[36,128], index: 1, kind: input, shape index: {}]
  %s2 = inlined_call_operand.vmem [shape: f32[1,128], index: 2, kind: input, shape index: {}]
  %s3 = inlined_call_operand.vmem [shape: f32[1,128], index: 3, kind: input, shape index: {}]
  %s4 = inlined_call_operand.vmem [shape: bf16[512,128], index: 4, kind: output, shape index: {}]
  %s5 = sld [smem:[#allocation0]]
  $region49: #{conv_block_forward.1} parent=0
    _
  %s7 = ssub.s32 1, %s5
  %s8 = scalar_select 0, %s7, %s5
  loop: start=0, step=1, limit=4
  $region2: #{conv_block_forward.1} parent=0 // loop_pre_header
    _
  $region3: #{conv_block_forward.1} parent=0 // loop_header
    %s10 = sphi 0, %s14
    %p11 = scmp.ge.s32.totalorder %s10, 4
    %s20 = sphi 0, %s22
    %s23 = sphi 0, %s20
    %s24 = sphi 0, %s23
    %s40 = sphi 0, %s24
    %s44 = sphi 0, %s44
    %s46 = sphi 0, %s44
    %s47 = sphi 0, %s46
    %s61 = sphi 0, %s47
    %s65 = sphi 0, %s65
    %s67 = sphi 0, %s65
    %s68 = sphi 0, %s67
    %s82 = sphi 0, %s68
    %s86 = sphi 0, %s86
    %s88 = sphi 0, %s86
    %s89 = sphi 0, %s88
    %s103 = sphi 0, %s89
    %s109 = sphi 0, %s111
    %s112 = sphi 0, %s109
    %s113 = sphi 0, %s112
    %s129 = sphi 0, %s113
  $region4: #{conv_block_forward.1} parent=0 // loop_header_branch
    %13 = sbr.rel (%p11) target = $region8
  $region5: #{conv_block_forward.1} parent=0 // loop_body
    %s15 = ssub.s32 %s10, 1
    %s16 = ssub.s32 %s10, 2
    %s17 = sadd.s32 %s10, 1
    %s18 = ssub.s32 %s10, %s17
    %p19 = scmp.eq.s32.totalorder %s18, 0
    %s21 = sadd.s32 %s20, 1
    %s22 = scalar_select %p19, %s20, %s21
    %p25 = pneg %p19
    %p26 = scmp.eq.s32.totalorder %s10, 1
    %p27 = por %p25, %p26
    %p28 = scmp.ne.s32.totalorder %s20, %s23
    %p29 = scmp.eq.s32.totalorder %s10, 0
    %p30 = por %p28, %p29
    %p31 = scmp.ne.s32.totalorder %s20, %s23
    %p32 = scmp.eq.s32.totalorder %s15, 1
    %p33 = por %p31, %p32
    %p34 = scmp.ne.s32.totalorder %s23, %s24
    %p35 = scmp.eq.s32.totalorder %s15, 0
    %p36 = por %p34, %p35
    %p37 = scmp.ne.s32.totalorder %s23, %s24
    %p38 = scmp.eq.s32.totalorder %s16, 1
    %p39 = por %p37, %p38
    %p41 = scmp.ne.s32.totalorder %s24, %s40
    %p42 = scmp.eq.s32.totalorder %s16, 0
    %p43 = por %p41, %p42
    %s45 = sadd.s32 %s44, 1
    %p48 = scmp.eq.s32.totalorder %s10, 1
    %p49 = scmp.ne.s32.totalorder %s44, %s46
    %p50 = scmp.eq.s32.totalorder %s10, 0
    %p51 = por %p49, %p50
    %p52 = scmp.ne.s32.totalorder %s44, %s46
    %p53 = scmp.eq.s32.totalorder %s15, 1
    %p54 = por %p52, %p53
    %p55 = scmp.ne.s32.totalorder %s46, %s47
    %p56 = scmp.eq.s32.totalorder %s15, 0
    %p57 = por %p55, %p56
    %p58 = scmp.ne.s32.totalorder %s46, %s47
    %p59 = scmp.eq.s32.totalorder %s16, 1
    %p60 = por %p58, %p59
    %p62 = scmp.ne.s32.totalorder %s47, %s61
    %p63 = scmp.eq.s32.totalorder %s16, 0
    %p64 = por %p62, %p63
    %s66 = sadd.s32 %s65, 1
    %p69 = scmp.eq.s32.totalorder %s10, 1
    %p70 = scmp.ne.s32.totalorder %s65, %s67
    %p71 = scmp.eq.s32.totalorder %s10, 0
    %p72 = por %p70, %p71
    %p73 = scmp.ne.s32.totalorder %s65, %s67
    %p74 = scmp.eq.s32.totalorder %s15, 1
    %p75 = por %p73, %p74
    %p76 = scmp.ne.s32.totalorder %s67, %s68
    %p77 = scmp.eq.s32.totalorder %s15, 0
    %p78 = por %p76, %p77
    %p79 = scmp.ne.s32.totalorder %s67, %s68
    %p80 = scmp.eq.s32.totalorder %s16, 1
    %p81 = por %p79, %p80
    %p83 = scmp.ne.s32.totalorder %s68, %s82
    %p84 = scmp.eq.s32.totalorder %s16, 0
    %p85 = por %p83, %p84
    %s87 = sadd.s32 %s86, 1
    %p90 = scmp.eq.s32.totalorder %s10, 1
    %p91 = scmp.ne.s32.totalorder %s86, %s88
    %p92 = scmp.eq.s32.totalorder %s10, 0
    %p93 = por %p91, %p92
    %p94 = scmp.ne.s32.totalorder %s86, %s88
    %p95 = scmp.eq.s32.totalorder %s15, 1
    %p96 = por %p94, %p95
    %p97 = scmp.ne.s32.totalorder %s88, %s89
    %p98 = scmp.eq.s32.totalorder %s15, 0
    %p99 = por %p97, %p98
    %p100 = scmp.ne.s32.totalorder %s88, %s89
    %p101 = scmp.eq.s32.totalorder %s16, 1
    %p102 = por %p100, %p101
    %p104 = scmp.ne.s32.totalorder %s89, %s103
    %p105 = scmp.eq.s32.totalorder %s16, 0
    %p106 = por %p104, %p105
    %s107 = ssub.s32 %s10, %s17
    %p108 = scmp.eq.s32.totalorder %s107, 0
    %s110 = sadd.s32 %s109, 1
    %s111 = scalar_select %p108, %s109, %s110
    %p114 = pneg %p108
    %p115 = scmp.eq.s32.totalorder %s10, 1
    %p116 = por %p114, %p115
    %p117 = scmp.ne.s32.totalorder %s109, %s112
    %p118 = scmp.eq.s32.totalorder %s10, 0
    %p119 = por %p117, %p118
    %p120 = scmp.ne.s32.totalorder %s109, %s112
    %p121 = scmp.eq.s32.totalorder %s15, 1
    %p122 = por %p120, %p121
    %p123 = scmp.ne.s32.totalorder %s112, %s113
    %p124 = scmp.eq.s32.totalorder %s15, 0
    %p125 = por %p123, %p124
    %p126 = scmp.ne.s32.totalorder %s112, %s113
    %p127 = scmp.eq.s32.totalorder %s16, 1
    %p128 = por %p126, %p127
    %p130 = scmp.ne.s32.totalorder %s113, %s129
    %p131 = scmp.eq.s32.totalorder %s16, 0
    %p132 = por %p130, %p131
    %p133 = scmp.le.s32.totalorder 1, %s10
    %p134 = scmp.lt.s32.totalorder %s10, 3
    %p135 = pnand %p133, %p134
    %p136 = pneg %p135
    // Predicated region
    $region9: #{conv_block_forward.1} parent=5 // pred_check
      _
    $region10: #{conv_block_forward.1} parent=5 // pred_check_branch
      %138 = sbr.rel (%p135) target = $region12
    $region11: #{conv_block_forward.1} parent=5 // pred_region
      %s139 = ssub.s32 %s10, 1
      // Predicated region
      $region13: #{conv_block_forward.1} parent=11 // pred_check
        %p140 = pneg %p57
      $region14: #{conv_block_forward.1} parent=11 // pred_check_branch
        %142 = sbr.rel (%p140) target = $region16
      $region15: #{conv_block_forward.1} parent=11 // pred_region
        _
      $region16: #{conv_block_forward.1} parent=11 // pred_fallthru
        _
      // Predicated region
      $region17: #{conv_block_forward.1} parent=11 // pred_check
        %p143 = pneg %p78
      $region18: #{conv_block_forward.1} parent=11 // pred_check_branch
        %145 = sbr.rel (%p143) target = $region20
      $region19: #{conv_block_forward.1} parent=11 // pred_region
        _
      $region20: #{conv_block_forward.1} parent=11 // pred_fallthru
        _
      // Predicated region
      $region21: #{conv_block_forward.1} parent=11 // pred_check
        %p146 = pneg %p99
      $region22: #{conv_block_forward.1} parent=11 // pred_check_branch
        %148 = sbr.rel (%p146) target = $region24
      $region23: #{conv_block_forward.1} parent=11 // pred_region
        _
      $region24: #{conv_block_forward.1} parent=11 // pred_fallthru
        _
    $region12: #{conv_block_forward.1} parent=5 // pred_fallthru
      _
    %p149 = scmp.lt.s32.totalorder %s10, 2
    // Predicated region
    $region25: #{conv_block_forward.1} parent=5 // pred_check
      %p150 = pneg %p149
    $region26: #{conv_block_forward.1} parent=5 // pred_check_branch
      %152 = sbr.rel (%p150) target = $region28
    $region27: #{conv_block_forward.1} parent=5 // pred_region
      // Predicated region
      $region29: #{conv_block_forward.1} parent=27 // pred_check
        %p153 = pneg %p30
      $region30: #{conv_block_forward.1} parent=27 // pred_check_branch
        %155 = sbr.rel (%p153) target = $region32
      $region31: #{conv_block_forward.1} parent=27 // pred_region
        %s156 = smul.u32 32, %s10
        %p157 = scmp.lt.s32.totalorder %s156, 63
        %s158 = scalar_select %p157, %s156, 63
        %s159 = smul.addr %s158, 4
        %s160 = scalar_lea.vmem %s0, %s159
        %s161 = smul.u32 32, %s10
      $region32: #{conv_block_forward.1} parent=27 // pred_fallthru
        _
    $region28: #{conv_block_forward.1} parent=5 // pred_fallthru
      _
    %p162 = scmp.le.s32.totalorder 1, %s10
    %p163 = scmp.lt.s32.totalorder %s10, 3
    %p164 = pnand %p162, %p163
    %p165 = pneg %p164
    // Predicated region
    $region33: #{conv_block_forward.1} parent=5 // pred_check
      _
    $region34: #{conv_block_forward.1} parent=5 // pred_check_branch
      %167 = sbr.rel (%p164) target = $region36
    $region35: #{conv_block_forward.1} parent=5 // pred_region
      %s168 = ssub.s32 %s10, 1
      %s169 = smul.u32 32, %s15
      %p170 = scmp.lt.s32.totalorder %s169, 63
      %s171 = scalar_select %p170, %s169, 63
      %s172 = smul.addr %s171, 4
      %s173 = scalar_lea.vmem %s0, %s172
      %p174 = pneg %p36
      %p175 = pneg %p33
      %p176 = pneg %p57
      %p177 = pneg %p54
      %p178 = pneg %p78
      %p179 = pneg %p75
      %p180 = pneg %p99
      %p181 = pneg %p96
      %p182 = pneg %p125
      %p183 = pneg %p122
      %s184 = smul.u32 32, %s15
      %p185 = scmp.lt.s32.totalorder %s184, 63
      %s186 = scalar_select %p185, %s184, 63
      %s187 = smul.addr %s186, 4
      %s188 = scalar_lea.vmem %s4, %s187
      %s189 = smul.u32 32, %s15
      %p190 = scmp.lt.s32.totalorder %s189, 63
      %s191 = scalar_select %p190, %s189, 63
      %s192 = smul.addr %s191, 4
      %s193 = scalar_lea.vmem %s0, %s192
      %s194 = smul.u32 32, %s15
      %s195 = smul.u32 32, %s15
      %p196 = scmp.lt.s32.totalorder %s195, 63
      %s197 = scalar_select %p196, %s195, 63
      %s198 = smul.addr %s197, 4
      %s199 = scalar_lea.vmem %s4, %s198
      %s200 = smul.u32 32, %s15
      %v202 = vld [vmem:[%s193] sm:$0xf]
      %v203 = vld [vmem:[%s193 + $0x4] sm:$0xf]
      %v204 = vld [vmem:[%s193 + $0x8] sm:$0xf]
      %v205 = vld [vmem:[%s193 + $0xc] sm:$0xf]
      %v206 = vld [vmem:[%s193 + $0x10] sm:$0xf]
      %v207 = vld [vmem:[%s193 + $0x14] sm:$0xf]
      %v208 = vld [vmem:[%s193 + $0x18] sm:$0xf]
      %v209 = vld [vmem:[%s193 + $0x1c] sm:$0xf]
      %v210 = vld [vmem:[%s193 + $0x20] sm:$0xf]
      %v211 = vld [vmem:[%s193 + $0x24] sm:$0xf]
      %v212 = vld [vmem:[%s193 + $0x28] sm:$0xf]
      %v213 = vld [vmem:[%s193 + $0x2c] sm:$0xf]
      %v214 = vld [vmem:[%s193 + $0x30] sm:$0xf]
      %v215 = vld [vmem:[%s193 + $0x34] sm:$0xf]
      %v216 = vld [vmem:[%s193 + $0x38] sm:$0xf]
      %v217 = vld [vmem:[%s193 + $0x3c] sm:$0xf]
      %v218 = vld [vmem:[%s193 + $0x40] sm:$0xf]
      %v219 = vld [vmem:[%s193 + $0x44] sm:$0xf]
      %v220 = vld [vmem:[%s193 + $0x48] sm:$0xf]
      %v221 = vld [vmem:[%s193 + $0x4c] sm:$0xf]
      %v222 = vld [vmem:[%s193 + $0x50] sm:$0xf]
      %v223 = vld [vmem:[%s193 + $0x54] sm:$0xf]
      %v224 = vld [vmem:[%s193 + $0x58] sm:$0xf]
      %v225 = vld [vmem:[%s193 + $0x5c] sm:$0xf]
      %v226 = vld [vmem:[%s193 + $0x60] sm:$0xf]
      %v227 = vld [vmem:[%s193 + $0x64] sm:$0xf]
      %v228 = vld [vmem:[%s193 + $0x68] sm:$0xf]
      %v229 = vld [vmem:[%s193 + $0x6c] sm:$0xf]
      %v230 = vld [vmem:[%s193 + $0x70] sm:$0xf]
      %v231 = vld [vmem:[%s193 + $0x74] sm:$0xf]
      %v232 = vld [vmem:[%s193 + $0x78] sm:$0xf]
      %v233 = vld [vmem:[%s193 + $0x7c] sm:$0xf]
      %v234 = vld [vmem:[%s1] sm:$0xf]
      %v235 = vld [vmem:[%s1 + $0x4] sm:$0xf]
      %v236 = vld [vmem:[%s1 + $0x8] sm:$0xf]
      %v237 = vld [vmem:[%s1 + $0xc] sm:$0xf]
      %v238 = vld [vmem:[%s1 + $0x10] sm:$0x3]
      %v271 = vunpack.c.l.b16 %v202
      %v272 = vunpack.c.l.b16 %v203
      %v273 = vunpack.c.l.b16 %v204
      %v274 = vunpack.c.l.b16 %v205
      %v275 = vunpack.c.l.b16 %v206
      %v276 = vunpack.c.l.b16 %v207
      %v277 = vunpack.c.l.b16 %v208
      %v278 = vunpack.c.l.b16 %v209
      %v279 = vunpack.c.l.b16 %v210
      %v280 = vunpack.c.l.b16 %v211
      %v281 = vunpack.c.l.b16 %v212
      %v282 = vunpack.c.l.b16 %v213
      %v283 = vunpack.c.l.b16 %v214
      %v284 = vunpack.c.l.b16 %v215
      %v285 = vunpack.c.l.b16 %v216
      %v286 = vunpack.c.l.b16 %v217
      %v287 = vunpack.c.l.b16 %v218
      %v288 = vunpack.c.l.b16 %v219
      %v289 = vunpack.c.l.b16 %v220
      %v290 = vunpack.c.l.b16 %v221
      %v291 = vunpack.c.l.b16 %v222
      %v292 = vunpack.c.l.b16 %v223
      %v293 = vunpack.c.l.b16 %v224
      %v294 = vunpack.c.l.b16 %v225
      %v295 = vunpack.c.l.b16 %v226
      %v296 = vunpack.c.l.b16 %v227
      %v297 = vunpack.c.l.b16 %v228
      %v298 = vunpack.c.l.b16 %v229
      %v299 = vunpack.c.l.b16 %v230
      %v300 = vunpack.c.l.b16 %v231
      %v301 = vunpack.c.l.b16 %v232
      %v302 = vunpack.c.l.b16 %v233
      %v303 = vpack.c.b16 %v272, %v271
      %v304 = vpack.c.b16 %v274, %v273
      %v305 = vpack.c.b16 %v276, %v275
      %v306 = vpack.c.b16 %v278, %v277
      %v307 = vpack.c.b16 %v280, %v279
      %v308 = vpack.c.b16 %v282, %v281
      %v309 = vpack.c.b16 %v284, %v283
      %v310 = vpack.c.b16 %v286, %v285
      %v311 = vpack.c.b16 %v288, %v287
      %v312 = vpack.c.b16 %v290, %v289
      %v313 = vpack.c.b16 %v292, %v291
      %v314 = vpack.c.b16 %v294, %v293
      %v315 = vpack.c.b16 %v296, %v295
      %v316 = vpack.c.b16 %v298, %v297
      %v317 = vpack.c.b16 %v300, %v299
      %v318 = vpack.c.b16 %v302, %v301
      %v324 = vunpack.c.l.b16 %v234
      %v325 = vunpack.c.l.b16 %v235
      %v326 = vunpack.c.l.b16 %v236
      %v327 = vunpack.c.l.b16 %v237
      %v328 = vunpack.c.l.b16 %v238
      %v329 = vpack.c.b16 %v325, %v324
      %v330 = vpack.c.b16 %v327, %v326
      %v331 = vpack.c.b16 %v328, %v328
      %vm334 = vcmask 293888
      %v336 = vsel %vm334, %v303, 0
      %v339 = vsel %vm334, %v304, 0
      %v342 = vsel %vm334, %v305, 0
      %v345 = vsel %vm334, %v306, 0
      %v348 = vsel %vm334, %v307, 0
      %v351 = vsel %vm334, %v308, 0
      %v354 = vsel %vm334, %v309, 0
      %v357 = vsel %vm334, %v310, 0
      %v360 = vsel %vm334, %v311, 0
      %v363 = vsel %vm334, %v312, 0
      %v366 = vsel %vm334, %v313, 0
      %v369 = vsel %vm334, %v314, 0
      %v372 = vsel %vm334, %v315, 0
      %v375 = vsel %vm334, %v316, 0
      %v378 = vsel %vm334, %v317, 0
      %v381 = vsel %vm334, %v318, 0
      %vm383 = vcmask 1041408
      %v385 = vsel %vm383, %v331, 0
      %387 = vmatprep.subr.bf16.mxu0 0
      %388 = vmatpush1.bf16.msra.mxu0 0
      %389 = vmatprep.subr.bf16.mxu0 0
      %390 = vmatpush1.bf16.msra.mxu0 0
      %391 = vmatprep.subr.bf16.mxu0 0
      %392 = vmatpush1.bf16.msra.mxu0 0
      %393 = vmatprep.subr.bf16.mxu0 0
      %394 = vmatpush1.bf16.msra.mxu0 0
      %395 = vmatprep.subr.bf16.mxu0 0
      %396 = vmatpush1.bf16.msra.mxu0 0
      %397 = vmatprep.subr.bf16.mxu0 0
      %398 = vmatpush1.bf16.msra.mxu0 %v385
      %399 = vmatprep.subr.bf16.mxu0 0
      %400 = vmatpush1.bf16.msra.mxu0 %v330
      %401 = vmatprep.subr.bf16.mxu0 0
      %402 = vmatpush1.bf16.msra.mxu0 %v329
      %403 = vmatprep.subr.bf16.mxu0 0
      %404 = vmatpush2.bf16.msra.mxu0 0
      %405 = vmatprep.subr.bf16.mxu0 0
      %406 = vmatpush2.bf16.msra.mxu0 0
      %407 = vmatprep.subr.bf16.mxu0 0
      %408 = vmatpush2.bf16.msra.mxu0 0
      %409 = vmatprep.subr.bf16.mxu0 0
      %410 = vmatpush2.bf16.msra.mxu0 0
      %411 = vmatprep.subr.bf16.mxu0 0
      %412 = vmatpush2.bf16.msra.mxu0 0
      %413 = vmatprep.subr.bf16.mxu0 0
      %414 = vmatpush2.bf16.msra.mxu0 0
      %415 = vmatprep.subr.bf16.mxu0 0
      %416 = vmatpush2.bf16.msra.mxu0 0
      %417 = vmatprep.subr.bf16.mxu0 0
      %418 = vmatpush2.bf16.msra.mxu0 0
      %419 = vmatprep.mubr.bf16.mxu0 0
      %420 = vmatmul.mubr.bf16.gmra.mxu0 %v336
      %v421 = vpop.f32.mrf.mxu0
      %v422 = vadd.f32 0.0, %v421
      %v423 = vpop.f32.mrf.mxu0
      %v424 = vpop.f32.mrf.mxu0
      %v425 = vadd.f32 0.0, %v424
      %v426 = vpop.f32.mrf.mxu0
      %427 = vmatprep.mubr.bf16.mxu0 0
      %428 = vmatmul.mubr.bf16.gmra.mxu0 %v339
      %v429 = vpop.f32.mrf.mxu0
      %v430 = vadd.f32 0.0, %v429
      %v431 = vpop.f32.mrf.mxu0
      %v432 = vpop.f32.mrf.mxu0
      %v433 = vadd.f32 0.0, %v432
      %v434 = vpop.f32.mrf.mxu0
      %435 = vmatprep.mubr.bf16.mxu0 0
      %436 = vmatmul.mubr.bf16.gmra.mxu0 %v342
      %v437 = vpop.f32.mrf.mxu0
      %v438 = vadd.f32 0.0, %v437
      %v439 = vpop.f32.mrf.mxu0
      %v440 = vpop.f32.mrf.mxu0
      %v441 = vadd.f32 0.0, %v440
      %v442 = vpop.f32.mrf.mxu0
      %443 = vmatprep.mubr.bf16.mxu0 0
      %444 = vmatmul.mubr.bf16.gmra.mxu0 %v345
      %v445 = vpop.f32.mrf.mxu0
      %v446 = vadd.f32 0.0, %v445
      %v447 = vpop.f32.mrf.mxu0
      %v448 = vpop.f32.mrf.mxu0
      %v449 = vadd.f32 0.0, %v448
      %v450 = vpop.f32.mrf.mxu0
      %451 = vmatprep.mubr.bf16.mxu0 0
      %452 = vmatmul.mubr.bf16.gmra.mxu0 %v348
      %v453 = vpop.f32.mrf.mxu0
      %v454 = vadd.f32 0.0, %v453
      %v455 = vpop.f32.mrf.mxu0
      %v456 = vpop.f32.mrf.mxu0
      %v457 = vadd.f32 0.0, %v456
      %v458 = vpop.f32.mrf.mxu0
      %459 = vmatprep.mubr.bf16.mxu0 0
      %460 = vmatmul.mubr.bf16.gmra.mxu0 %v351
      %v461 = vpop.f32.mrf.mxu0
      %v462 = vadd.f32 0.0, %v461
      %v463 = vpop.f32.mrf.mxu0
      %v464 = vpop.f32.mrf.mxu0
      %v465 = vadd.f32 0.0, %v464
      %v466 = vpop.f32.mrf.mxu0
      %467 = vmatprep.mubr.bf16.mxu0 0
      %468 = vmatmul.mubr.bf16.gmra.mxu0 %v354
      %v469 = vpop.f32.mrf.mxu0
      %v470 = vadd.f32 0.0, %v469
      %v471 = vpop.f32.mrf.mxu0
      %v472 = vpop.f32.mrf.mxu0
      %v473 = vadd.f32 0.0, %v472
      %v474 = vpop.f32.mrf.mxu0
      %475 = vmatprep.mubr.bf16.mxu0 0
      %476 = vmatmul.mubr.bf16.gmra.mxu0 %v357
      %v477 = vpop.f32.mrf.mxu0
      %v478 = vadd.f32 0.0, %v477
      %v479 = vpop.f32.mrf.mxu0
      %v480 = vpop.f32.mrf.mxu0
      %v481 = vadd.f32 0.0, %v480
      %v482 = vpop.f32.mrf.mxu0
      %483 = vmatprep.mubr.bf16.mxu0 0
      %484 = vmatmul.mubr.bf16.gmra.mxu0 %v360
      %v485 = vpop.f32.mrf.mxu0
      %v486 = vadd.f32 0.0, %v485
      %v487 = vpop.f32.mrf.mxu0
      %v488 = vpop.f32.mrf.mxu0
      %v489 = vadd.f32 0.0, %v488
      %v490 = vpop.f32.mrf.mxu0
      %491 = vmatprep.mubr.bf16.mxu0 0
      %492 = vmatmul.mubr.bf16.gmra.mxu0 %v363
      %v493 = vpop.f32.mrf.mxu0
      %v494 = vadd.f32 0.0, %v493
      %v495 = vpop.f32.mrf.mxu0
      %v496 = vpop.f32.mrf.mxu0
      %v497 = vadd.f32 0.0, %v496
      %v498 = vpop.f32.mrf.mxu0
      %499 = vmatprep.mubr.bf16.mxu0 0
      %500 = vmatmul.mubr.bf16.gmra.mxu0 %v366
      %v501 = vpop.f32.mrf.mxu0
      %v502 = vadd.f32 0.0, %v501
      %v503 = vpop.f32.mrf.mxu0
      %v504 = vpop.f32.mrf.mxu0
      %v505 = vadd.f32 0.0, %v504
      %v506 = vpop.f32.mrf.mxu0
      %507 = vmatprep.mubr.bf16.mxu0 0
      %508 = vmatmul.mubr.bf16.gmra.mxu0 %v369
      %v509 = vpop.f32.mrf.mxu0
      %v510 = vadd.f32 0.0, %v509
      %v511 = vpop.f32.mrf.mxu0
      %v512 = vpop.f32.mrf.mxu0
      %v513 = vadd.f32 0.0, %v512
      %v514 = vpop.f32.mrf.mxu0
      %515 = vmatprep.mubr.bf16.mxu0 0
      %516 = vmatmul.mubr.bf16.gmra.mxu0 %v372
      %v517 = vpop.f32.mrf.mxu0
      %v518 = vadd.f32 0.0, %v517
      %v519 = vpop.f32.mrf.mxu0
      %v520 = vpop.f32.mrf.mxu0
      %v521 = vadd.f32 0.0, %v520
      %v522 = vpop.f32.mrf.mxu0
      %523 = vmatprep.mubr.bf16.mxu0 0
      %524 = vmatmul.mubr.bf16.gmra.mxu0 %v375
      %v525 = vpop.f32.mrf.mxu0
      %v526 = vadd.f32 0.0, %v525
      %v527 = vpop.f32.mrf.mxu0
      %v528 = vpop.f32.mrf.mxu0
      %v529 = vadd.f32 0.0, %v528
      %v530 = vpop.f32.mrf.mxu0
      %531 = vmatprep.mubr.bf16.mxu0 0
      %532 = vmatmul.mubr.bf16.gmra.mxu0 %v378
      %v533 = vpop.f32.mrf.mxu0
      %v534 = vadd.f32 0.0, %v533
      %v535 = vpop.f32.mrf.mxu0
      %v536 = vpop.f32.mrf.mxu0
      %v537 = vadd.f32 0.0, %v536
      %v538 = vpop.f32.mrf.mxu0
      %539 = vmatprep.mubr.bf16.mxu0 0
      %540 = vmatmul.mubr.bf16.gmra.mxu0 %v381
      %v541 = vpop.f32.mrf.mxu0
      %v542 = vadd.f32 0.0, %v541
      %v543 = vpop.f32.mrf.mxu0
      %v544 = vpop.f32.mrf.mxu0
      %v545 = vadd.f32 0.0, %v544
      %v546 = vpop.f32.mrf.mxu0
      %547 = vdwg.mxu0
      %v548 = vld [vmem:[%s2] sm:$0x1]
      %v550 = vlaneseq
      %v551 = vshrl.u32 %v550, 7
      %v552 = vsub.s32 0, %v551
      %v553 = vrot.slane %v548, %v552
      %v555 = vmul.f32 %v422, %v553
      %v556 = vmul.f32 %v425, %v553
      %v557 = vmul.f32 %v430, %v553
      %v558 = vmul.f32 %v433, %v553
      %v559 = vmul.f32 %v438, %v553
      %v560 = vmul.f32 %v441, %v553
      %v561 = vmul.f32 %v446, %v553
      %v562 = vmul.f32 %v449, %v553
      %v563 = vmul.f32 %v454, %v553
      %v564 = vmul.f32 %v457, %v553
      %v565 = vmul.f32 %v462, %v553
      %v566 = vmul.f32 %v465, %v553
      %v567 = vmul.f32 %v470, %v553
      %v568 = vmul.f32 %v473, %v553
      %v569 = vmul.f32 %v478, %v553
      %v570 = vmul.f32 %v481, %v553
      %v571 = vmul.f32 %v486, %v553
      %v572 = vmul.f32 %v489, %v553
      %v573 = vmul.f32 %v494, %v553
      %v574 = vmul.f32 %v497, %v553
      %v575 = vmul.f32 %v502, %v553
      %v576 = vmul.f32 %v505, %v553
      %v577 = vmul.f32 %v510, %v553
      %v578 = vmul.f32 %v513, %v553
      %v579 = vmul.f32 %v518, %v553
      %v580 = vmul.f32 %v521, %v553
      %v581 = vmul.f32 %v526, %v553
      %v582 = vmul.f32 %v529, %v553
      %v583 = vmul.f32 %v534, %v553
      %v584 = vmul.f32 %v537, %v553
      %v585 = vmul.f32 %v542, %v553
      %v586 = vmul.f32 %v545, %v553
      %v587 = vld [vmem:[%s3] sm:$0x1]
      %v589 = vlaneseq
      %v590 = vshrl.u32 %v589, 7
      %v591 = vsub.s32 0, %v590
      %v592 = vrot.slane %v587, %v591
      %v594 = vadd.f32 %v555, %v592
      %v595 = vadd.f32 %v556, %v592
      %v596 = vadd.f32 %v557, %v592
      %v597 = vadd.f32 %v558, %v592
      %v598 = vadd.f32 %v559, %v592
      %v599 = vadd.f32 %v560, %v592
      %v600 = vadd.f32 %v561, %v592
      %v601 = vadd.f32 %v562, %v592
      %v602 = vadd.f32 %v563, %v592
      %v603 = vadd.f32 %v564, %v592
      %v604 = vadd.f32 %v565, %v592
      %v605 = vadd.f32 %v566, %v592
      %v606 = vadd.f32 %v567, %v592
      %v607 = vadd.f32 %v568, %v592
      %v608 = vadd.f32 %v569, %v592
      %v609 = vadd.f32 %v570, %v592
      %v610 = vadd.f32 %v571, %v592
      %v611 = vadd.f32 %v572, %v592
      %v612 = vadd.f32 %v573, %v592
      %v613 = vadd.f32 %v574, %v592
      %v614 = vadd.f32 %v575, %v592
      %v615 = vadd.f32 %v576, %v592
      %v616 = vadd.f32 %v577, %v592
      %v617 = vadd.f32 %v578, %v592
      %v618 = vadd.f32 %v579, %v592
      %v619 = vadd.f32 %v580, %v592
      %v620 = vadd.f32 %v581, %v592
      %v621 = vadd.f32 %v582, %v592
      %v622 = vadd.f32 %v583, %v592
      %v623 = vadd.f32 %v584, %v592
      %v624 = vadd.f32 %v585, %v592
      %v625 = vadd.f32 %v586, %v592
      %v626 = vmax.f32 %v594, 0.0
      %v627 = vmax.f32 %v595, 0.0
      %v628 = vmax.f32 %v596, 0.0
      %v629 = vmax.f32 %v597, 0.0
      %v630 = vmax.f32 %v598, 0.0
      %v631 = vmax.f32 %v599, 0.0
      %v632 = vmax.f32 %v600, 0.0
      %v633 = vmax.f32 %v601, 0.0
      %v634 = vmax.f32 %v602, 0.0
      %v635 = vmax.f32 %v603, 0.0
      %v636 = vmax.f32 %v604, 0.0
      %v637 = vmax.f32 %v605, 0.0
      %v638 = vmax.f32 %v606, 0.0
      %v639 = vmax.f32 %v607, 0.0
      %v640 = vmax.f32 %v608, 0.0
      %v641 = vmax.f32 %v609, 0.0
      %v642 = vmax.f32 %v610, 0.0
      %v643 = vmax.f32 %v611, 0.0
      %v644 = vmax.f32 %v612, 0.0
      %v645 = vmax.f32 %v613, 0.0
      %v646 = vmax.f32 %v614, 0.0
      %v647 = vmax.f32 %v615, 0.0
      %v648 = vmax.f32 %v616, 0.0
      %v649 = vmax.f32 %v617, 0.0
      %v650 = vmax.f32 %v618, 0.0
      %v651 = vmax.f32 %v619, 0.0
      %v652 = vmax.f32 %v620, 0.0
      %v653 = vmax.f32 %v621, 0.0
      %v654 = vmax.f32 %v622, 0.0
      %v655 = vmax.f32 %v623, 0.0
      %v656 = vmax.f32 %v624, 0.0
      %v657 = vmax.f32 %v625, 0.0
      %v658 = vpack.c.bf16 %v627, %v626
      %v659 = vpack.c.bf16 %v629, %v628
      %v660 = vpack.c.bf16 %v631, %v630
      %v661 = vpack.c.bf16 %v633, %v632
      %v662 = vpack.c.bf16 %v635, %v634
      %v663 = vpack.c.bf16 %v637, %v636
      %v664 = vpack.c.bf16 %v639, %v638
      %v665 = vpack.c.bf16 %v641, %v640
      %v666 = vpack.c.bf16 %v643, %v642
      %v667 = vpack.c.bf16 %v645, %v644
      %v668 = vpack.c.bf16 %v647, %v646
      %v669 = vpack.c.bf16 %v649, %v648
      %v670 = vpack.c.bf16 %v651, %v650
      %v671 = vpack.c.bf16 %v653, %v652
      %v672 = vpack.c.bf16 %v655, %v654
      %v673 = vpack.c.bf16 %v657, %v656
      %v690 = vunpack.c.l.b16 %v658
      %v691 = vunpack.c.h.b16 %v658
      %v692 = vunpack.c.l.b16 %v659
      %v693 = vunpack.c.h.b16 %v659
      %v694 = vunpack.c.l.b16 %v660
      %v695 = vunpack.c.h.b16 %v660
      %v696 = vunpack.c.l.b16 %v661
      %v697 = vunpack.c.h.b16 %v661
      %v698 = vunpack.c.l.b16 %v662
      %v699 = vunpack.c.h.b16 %v662
      %v700 = vunpack.c.l.b16 %v663
      %v701 = vunpack.c.h.b16 %v663
      %v702 = vunpack.c.l.b16 %v664
      %v703 = vunpack.c.h.b16 %v664
      %v704 = vunpack.c.l.b16 %v665
      %v705 = vunpack.c.h.b16 %v665
      %v706 = vunpack.c.l.b16 %v666
      %v707 = vunpack.c.h.b16 %v666
      %v708 = vunpack.c.l.b16 %v667
      %v709 = vunpack.c.h.b16 %v667
      %v710 = vunpack.c.l.b16 %v668
      %v711 = vunpack.c.h.b16 %v668
      %v712 = vunpack.c.l.b16 %v669
      %v713 = vunpack.c.h.b16 %v669
      %v714 = vunpack.c.l.b16 %v670
      %v715 = vunpack.c.h.b16 %v670
      %v716 = vunpack.c.l.b16 %v671
      %v717 = vunpack.c.h.b16 %v671
      %v718 = vunpack.c.l.b16 %v672
      %v719 = vunpack.c.h.b16 %v672
      %v720 = vunpack.c.l.b16 %v673
      %v721 = vunpack.c.h.b16 %v673
      %v722 = vpack.c.b16 %v690, %v690
      %v723 = vpack.c.b16 %v691, %v691
      %v724 = vpack.c.b16 %v692, %v692
      %v725 = vpack.c.b16 %v693, %v693
      %v726 = vpack.c.b16 %v694, %v694
      %v727 = vpack.c.b16 %v695, %v695
      %v728 = vpack.c.b16 %v696, %v696
      %v729 = vpack.c.b16 %v697, %v697
      %v730 = vpack.c.b16 %v698, %v698
      %v731 = vpack.c.b16 %v699, %v699
      %v732 = vpack.c.b16 %v700, %v700
      %v733 = vpack.c.b16 %v701, %v701
      %v734 = vpack.c.b16 %v702, %v702
      %v735 = vpack.c.b16 %v703, %v703
      %v736 = vpack.c.b16 %v704, %v704
      %v737 = vpack.c.b16 %v705, %v705
      %v738 = vpack.c.b16 %v706, %v706
      %v739 = vpack.c.b16 %v707, %v707
      %v740 = vpack.c.b16 %v708, %v708
      %v741 = vpack.c.b16 %v709, %v709
      %v742 = vpack.c.b16 %v710, %v710
      %v743 = vpack.c.b16 %v711, %v711
      %v744 = vpack.c.b16 %v712, %v712
      %v745 = vpack.c.b16 %v713, %v713
      %v746 = vpack.c.b16 %v714, %v714
      %v747 = vpack.c.b16 %v715, %v715
      %v748 = vpack.c.b16 %v716, %v716
      %v749 = vpack.c.b16 %v717, %v717
      %v750 = vpack.c.b16 %v718, %v718
      %v751 = vpack.c.b16 %v719, %v719
      %v752 = vpack.c.b16 %v720, %v720
      %v753 = vpack.c.b16 %v721, %v721
      %786 = vst [vmem:[%s199] sm:$0xf] %v722
      %787 = vst [vmem:[%s199 + $0x4] sm:$0xf] %v723
      %788 = vst [vmem:[%s199 + $0x8] sm:$0xf] %v724
      %789 = vst [vmem:[%s199 + $0xc] sm:$0xf] %v725
      %790 = vst [vmem:[%s199 + $0x10] sm:$0xf] %v726
      %791 = vst [vmem:[%s199 + $0x14] sm:$0xf] %v727
      %792 = vst [vmem:[%s199 + $0x18] sm:$0xf] %v728
      %793 = vst [vmem:[%s199 + $0x1c] sm:$0xf] %v729
      %794 = vst [vmem:[%s199 + $0x20] sm:$0xf] %v730
      %795 = vst [vmem:[%s199 + $0x24] sm:$0xf] %v731
      %796 = vst [vmem:[%s199 + $0x28] sm:$0xf] %v732
      %797 = vst [vmem:[%s199 + $0x2c] sm:$0xf] %v733
      %798 = vst [vmem:[%s199 + $0x30] sm:$0xf] %v734
      %799 = vst [vmem:[%s199 + $0x34] sm:$0xf] %v735
      %800 = vst [vmem:[%s199 + $0x38] sm:$0xf] %v736
      %801 = vst [vmem:[%s199 + $0x3c] sm:$0xf] %v737
      %802 = vst [vmem:[%s199 + $0x40] sm:$0xf] %v738
      %803 = vst [vmem:[%s199 + $0x44] sm:$0xf] %v739
      %804 = vst [vmem:[%s199 + $0x48] sm:$0xf] %v740
      %805 = vst [vmem:[%s199 + $0x4c] sm:$0xf] %v741
      %806 = vst [vmem:[%s199 + $0x50] sm:$0xf] %v742
      %807 = vst [vmem:[%s199 + $0x54] sm:$0xf] %v743
      %808 = vst [vmem:[%s199 + $0x58] sm:$0xf] %v744
      %809 = vst [vmem:[%s199 + $0x5c] sm:$0xf] %v745
      %810 = vst [vmem:[%s199 + $0x60] sm:$0xf] %v746
      %811 = vst [vmem:[%s199 + $0x64] sm:$0xf] %v747
      %812 = vst [vmem:[%s199 + $0x68] sm:$0xf] %v748
      %813 = vst [vmem:[%s199 + $0x6c] sm:$0xf] %v749
      %814 = vst [vmem:[%s199 + $0x70] sm:$0xf] %v750
      %815 = vst [vmem:[%s199 + $0x74] sm:$0xf] %v751
      %816 = vst [vmem:[%s199 + $0x78] sm:$0xf] %v752
      %817 = vst [vmem:[%s199 + $0x7c] sm:$0xf] %v753
      %s818 = smul.u32 32, %s15
      %p819 = scmp.lt.s32.totalorder %s818, 63
      %s820 = scalar_select %p819, %s818, 63
      %s821 = smul.addr %s820, 4
      %s822 = scalar_lea.vmem %s4, %s821
      // Predicated region
      $region37: #{conv_block_forward.1} parent=35 // pred_check
        %p823 = pneg %p122
      $region38: #{conv_block_forward.1} parent=35 // pred_check_branch
        %825 = sbr.rel (%p823) target = $region40
      $region39: #{conv_block_forward.1} parent=35 // pred_region
        %s826 = smul.u32 32, %s15
      $region40: #{conv_block_forward.1} parent=35 // pred_fallthru
        _
    $region36: #{conv_block_forward.1} parent=5 // pred_fallthru
      _
    %p827 = scmp.le.s32.totalorder 2, %s10
    // Predicated region
    $region41: #{conv_block_forward.1} parent=5 // pred_check
      %p828 = pneg %p827
    $region42: #{conv_block_forward.1} parent=5 // pred_check_branch
      %830 = sbr.rel (%p828) target = $region44
    $region43: #{conv_block_forward.1} parent=5 // pred_region
      %s831 = ssub.s32 %s10, 2
      // Predicated region
      $region45: #{conv_block_forward.1} parent=43 // pred_check
        %p832 = pneg %p128
      $region46: #{conv_block_forward.1} parent=43 // pred_check_branch
        %834 = sbr.rel (%p832) target = $region48
      $region47: #{conv_block_forward.1} parent=43 // pred_region
        %s835 = smul.u32 32, %s16
        %p836 = scmp.lt.s32.totalorder %s835, 63
        %s837 = scalar_select %p836, %s835, 63
        %s838 = smul.addr %s837, 4
        %s839 = scalar_lea.vmem %s4, %s838
      $region48: #{conv_block_forward.1} parent=43 // pred_fallthru
        _
    $region44: #{conv_block_forward.1} parent=5 // pred_fallthru
      _
  $region6: #{conv_block_forward.1} parent=0 // loop_footer
    %s14 = sadd.s32 1, %s10
  $region7: #{conv_block_forward.1} parent=0 // loop_footer_branch
    %9 = sbr.rel target = $region3
  $region8: #{conv_block_forward.1} parent=0 // loop_exit
    _

</llo_original>
